<compile_context>
chip_gen: v7x
topology: tpu7x:2x2x1
jax: 0.10.0
libtpu: 0.0.40
codegen_flags: <defaults>
</compile_context>

<pallas_src>
import functools

import jax
import jax.numpy as jnp
import numpy as np
from jax.experimental import pallas as pl
from jax.experimental.pallas import tpu as pltpu


def _sc1_kernel(x_ref, samat_ref, vmask_ref, w1t_ref, w2t_ref, out_ref, *, cv):
    """Whole SC1_Block forward for all N samples in one invocation.

    x_ref:     (N, HW, C)     concatenated features, channels-last (vision lanes first)
    samat_ref: (2*HW+1, HW)   fused/transposed Toeplitz matrix [M_max.T; M_avg.T; bias row]
    vmask_ref: (1, C)         1.0 on vision lanes, 0.0 on sensor lanes
    w1t_ref:   (C, Cr)        SE squeeze weight, transposed
    w2t_ref:   (Cr, C)        SE excite weight, transposed
    out_ref:   (N, 2C)        packed outputs: [:, :C] = mire, [:, C:] = base
    """
    x = x_ref[...]                                   # (N, HW, C) == base_out
    n, hw, c = x.shape
    xv = x[:, :, :cv]                                # (N, HW, Cv) vision lanes

    # --- SpatialAttention: per-pixel channel max/mean -> fused 7x7 conv -> sigmoid ---
    mx = jnp.max(xv, axis=2)                         # (N, HW)
    mn = jnp.mean(xv, axis=2)                        # (N, HW)
    ones = jnp.ones((n, 1), jnp.float32)             # bias column (folded into matmul)
    rhs = jnp.concatenate([mx, mn, ones], axis=1)    # (N, 2HW+1)
    conv = jnp.dot(rhs, samat_ref[...],
                   preferred_element_type=jnp.float32)   # (N, HW) - single MXU dot
    sa = jax.nn.sigmoid(conv)[:, :, None]                # (N, HW, 1)

    # out_1 = cat(out_vision * sa, out_sensor): scale vision lanes only.
    vmask = vmask_ref[...][None, :, :]               # (1, 1, C)
    out1 = x * (1.0 + vmask * (sa - 1.0))            # (N, HW, C)

    # --- ChannelAttention: spatial max/avg pool -> shared SE MLP (fused) -> sigmoid ---
    p_max = jnp.max(out1, axis=1)                    # (N, C)
    p_avg = jnp.mean(out1, axis=1)                   # (N, C)
    pooled = jnp.concatenate([p_max, p_avg], axis=0)     # (2N, C)
    h = jnp.maximum(jnp.dot(pooled, w1t_ref[...],
                            preferred_element_type=jnp.float32), 0.0)   # (2N, Cr)
    h_sum = h[:n] + h[n:]                            # (N, Cr)   (exact: distributive)
    ca = jnp.dot(h_sum, w2t_ref[...],
                 preferred_element_type=jnp.float32)     # (N, C)
    ca = jax.nn.sigmoid(ca)

    out1 = out1 * ca[:, None, :] + x                 # residual with base_out

    # --- pooling heads ---
    base = jnp.mean(x, axis=1)                       # (N, C)  AvgPool2d(7,7) on 7x7
    mire = jnp.max(out1, axis=1) + base              # (N, C)

    # one lane-dense (N, 2C) store
    out_ref[...] = jnp.concatenate([mire, base], axis=1).astype(out_ref.dtype)


def _conv7x7_as_matrix(w_c):
    """Re-lay a (7,7) conv kernel (padding=3) into M with out[p] = sum_q M[p,q]*x[q]."""
    H = W = 7
    hw = H * W
    pi, pj = np.arange(hw) // W, np.arange(hw) % W
    qi, qj = np.arange(hw) // W, np.arange(hw) % W
    di = qi[None, :] - pi[:, None] + 3          # (HW_p, HW_q)
    dj = qj[None, :] - pj[:, None] + 3
    valid = (di >= 0) & (di < 7) & (dj >= 0) & (dj < 7)
    di_c = np.clip(di, 0, 6)
    dj_c = np.clip(dj, 0, 6)
    return jnp.where(jnp.asarray(valid), w_c[di_c, dj_c], 0.0).astype(jnp.float32)


def sc1_block_forward(inputs, sa_conv_w, sa_conv_b, ca_w1, ca_w2, *, num_vision=2):
    """Pallas implementation of SC1_Block.forward (4-modality path).

    inputs    : list of (N, C_i, 7, 7) feature maps; first `num_vision` are vision.
    sa_conv_w : (1, 2, 7, 7) SpatialAttention conv weight (ch0 = max, ch1 = mean).
    sa_conv_b : (1,)         SpatialAttention conv bias.
    ca_w1     : (C//r, C)    ChannelAttention SE squeeze weight (1x1 conv, no bias).
    ca_w2     : (C, C//r)    ChannelAttention SE excite weight (1x1 conv, no bias).
    Returns dict with 'mire' (N, C) and 'base' (N, C).
    """
    base_out = jnp.concatenate(inputs, axis=1)            # (N, C, H, W)
    n, c, h, w = base_out.shape
    if h != 7 or w != 7:
        raise ValueError("SC1_Block kernel supports 7x7 spatial maps only.")
    hw = h * w
    cv = sum(t.shape[1] for t in inputs[:num_vision])     # vision channel count
    cr = ca_w1.shape[0]

    # Layout plumbing (wrapper-side): channels-last, conv -> fused Toeplitz matmul.
    # TODO(synk): a channels-last producer would remove this concat/transpose pass.
    x = base_out.reshape(n, c, hw).transpose(0, 2, 1).astype(jnp.float32)   # (N, HW, C)

    m_max = _conv7x7_as_matrix(sa_conv_w[0, 0])            # (HW, HW)
    m_avg = _conv7x7_as_matrix(sa_conv_w[0, 1])            # (HW, HW)
    bias_row = jnp.broadcast_to(sa_conv_b.reshape(1, 1).astype(jnp.float32), (1, hw))
    sa_mat = jnp.concatenate([m_max.T, m_avg.T, bias_row], axis=0)          # (2HW+1, HW)

    vmask = (jnp.arange(c) < cv).astype(jnp.float32).reshape(1, c)          # (1, C)
    w1t = ca_w1.reshape(cr, c).T.astype(jnp.float32)       # (C, Cr)
    w2t = ca_w2.reshape(c, cr).T.astype(jnp.float32)       # (Cr, C)

    kernel = functools.partial(_sc1_kernel, cv=cv)

    out = pl.pallas_call(
        kernel,
        out_shape=jax.ShapeDtypeStruct((n, 2 * c), jnp.float32),
        grid_spec=pltpu.PrefetchScalarGridSpec(
            num_scalar_prefetch=0,
            grid=(1,),                                     # everything fits in VMEM
            in_specs=[
                pl.BlockSpec((n, hw, c), lambda i: (0, 0, 0)),
                pl.BlockSpec((2 * hw + 1, hw), lambda i: (0, 0)),
                pl.BlockSpec((1, c), lambda i: (0, 0)),
                pl.BlockSpec((c, cr), lambda i: (0, 0)),
                pl.BlockSpec((cr, c), lambda i: (0, 0)),
            ],
            out_specs=pl.BlockSpec((n, 2 * c), lambda i: (0, 0)),
        ),
        compiler_params=pltpu.CompilerParams(
            dimension_semantics=("arbitrary",),
        ),
    )(x, sa_mat, vmask, w1t, w2t)

    return {"mire": out[:, :c], "base": out[:, c:]}


def _reference(inputs, sa_w, sa_b, w1, w2, *, num_vision=2):
    """Pure-JAX mirror of the PyTorch SC1_Block forward (4-modality path)."""
    vision = inputs[:num_vision]
    sensor = inputs[num_vision:]
    base_out = jnp.concatenate(inputs, axis=1)
    out_vision = jnp.concatenate(vision, axis=1)
    out_sensor = jnp.concatenate(sensor, axis=1)

    mx = jnp.max(out_vision, axis=1, keepdims=True)
    mn = jnp.mean(out_vision, axis=1, keepdims=True)
    sa_in = jnp.concatenate([mx, mn], axis=1)                   # (N,2,H,W)
    conv = jax.lax.conv_general_dilated(
        sa_in, sa_w, window_strides=(1, 1), padding=((3, 3), (3, 3)),
        dimension_numbers=("NCHW", "OIHW", "NCHW"))
    sa = jax.nn.sigmoid(conv + sa_b.reshape(1, 1, 1, 1))        # (N,1,H,W)

    out_v = out_vision * sa
    out_1 = jnp.concatenate([out_v, out_sensor], axis=1)        # (N,C,H,W)

    pmax = jnp.max(out_1, axis=(2, 3))
    pavg = jnp.mean(out_1, axis=(2, 3))

    def se(v):
        return jnp.maximum(v @ w1.T, 0.0) @ w2.T

    ca = jax.nn.sigmoid(se(pmax) + se(pavg))                    # (N,C)
    out_1 = out_1 * ca[:, :, None, None] + base_out

    base = jnp.mean(base_out, axis=(2, 3))                      # AvgPool2d(7,7) on 7x7
    mire = jnp.max(out_1, axis=(2, 3)) + base
    return mire, base


if __name__ == "__main__":
    key = jax.random.PRNGKey(0)
    ks = jax.random.split(key, 8)

    n, h, w = 2, 7, 7
    ch = [16, 16, 16, 16]            # RGB, Depth, Acc, Gyro feature channels
    c_total = sum(ch)                # 64  (module's `channel`)
    reduction = 16
    cr = c_total // reduction        # 4

    inputs = [jax.random.normal(ks[i], (n, ch[i], h, w), dtype=jnp.float32)
              for i in range(4)]
    # Conv/SE weights (kaiming-ish scale, deterministic); conv bias nonzero to test path.
    sa_w = 0.1 * jax.random.normal(ks[4], (1, 2, 7, 7), dtype=jnp.float32)
    sa_b = 0.1 * jax.random.normal(ks[5], (1,), dtype=jnp.float32)
    ca_w1 = 0.1 * jax.random.normal(ks[6], (cr, c_total), dtype=jnp.float32)
    ca_w2 = 0.1 * jax.random.normal(ks[7], (c_total, cr), dtype=jnp.float32)

    out = sc1_block_forward(inputs, sa_w, sa_b, ca_w1, ca_w2, num_vision=2)
    jax.block_until_ready(out)

    mire_ref, base_ref = _reference(inputs, sa_w, sa_b, ca_w1, ca_w2, num_vision=2)
    np.testing.assert_allclose(np.asarray(out["mire"]), np.asarray(mire_ref),
                               rtol=1e-5, atol=1e-5)
    np.testing.assert_allclose(np.asarray(out["base"]), np.asarray(base_ref),
                               rtol=1e-5, atol=1e-5)

    print("KERNEL_OK")
</pallas_src>

<mosaic_0001>
module attributes {stable_mosaic.version = 11 : i64} {
  func.func @_sc1_kernel(%arg0: i32, %arg1: memref<2x49x64xf32, #tpu.memory_space<vmem>>, %arg2: memref<99x49xf32, #tpu.memory_space<vmem>>, %arg3: memref<1x64xf32, #tpu.memory_space<vmem>>, %arg4: memref<64x4xf32, #tpu.memory_space<vmem>>, %arg5: memref<4x64xf32, #tpu.memory_space<vmem>>, %arg6: memref<2x128xf32, #tpu.memory_space<vmem>>) attributes {dimension_semantics = [#tpu.dimension_semantics<arbitrary>], iteration_bounds = array<i64: 1>, scalar_prefetch = 0 : i64, scratch_operands = 0 : i64, tpu.core_type = #tpu.core_type<tc>, window_params = [{pipeline_mode = #tpu.pipeline_mode<synchronous>, transform_indices = @transform_0, window_bounds = array<i64: 2, 49, 64>}, {pipeline_mode = #tpu.pipeline_mode<synchronous>, transform_indices = @transform_1, window_bounds = array<i64: 99, 49>}, {pipeline_mode = #tpu.pipeline_mode<synchronous>, transform_indices = @transform_2, window_bounds = array<i64: 1, 64>}, {pipeline_mode = #tpu.pipeline_mode<synchronous>, transform_indices = @transform_3, window_bounds = array<i64: 64, 4>}, {pipeline_mode = #tpu.pipeline_mode<synchronous>, transform_indices = @transform_4, window_bounds = array<i64: 4, 64>}, {pipeline_mode = #tpu.pipeline_mode<synchronous>, transform_indices = @transform_5, window_bounds = array<i64: 2, 128>}]} {
    %c0 = arith.constant 0 : index
    %c0_0 = arith.constant 0 : index
    %c0_1 = arith.constant 0 : index
    %0 = vector.load %arg1[%c0, %c0_0, %c0_1] : memref<2x49x64xf32, #tpu.memory_space<vmem>>, vector<2x49x64xf32>
    %1 = vector.extract_strided_slice %0 {offsets = [0, 0, 0], sizes = [2, 49, 32], strides = [1, 1, 1]} : vector<2x49x64xf32> to vector<2x49x32xf32>
    %cst = arith.constant dense<0xFF800000> : vector<2x49xf32>
    %2 = vector.multi_reduction <maximumf>, %1, %cst [2] : vector<2x49x32xf32> to vector<2x49xf32>
    %cst_2 = arith.constant dense<0.000000e+00> : vector<2x49xf32>
    %3 = vector.multi_reduction <add>, %1, %cst_2 [2] : vector<2x49x32xf32> to vector<2x49xf32>
    %cst_3 = arith.constant 3.200000e+01 : f32
    %4 = vector.broadcast %cst_3 : f32 to vector<2x49xf32>
    %5 = arith.divf %3, %4 : vector<2x49xf32>
    %cst_4 = arith.constant 1.000000e+00 : f32
    %6 = vector.broadcast %cst_4 : f32 to vector<2x1xf32>
    %7 = tpu.concatenate %2, %5, %6 in 1 : vector<2x49xf32>, vector<2x49xf32>, vector<2x1xf32> -> vector<2x99xf32>
    %c0_5 = arith.constant 0 : index
    %c0_6 = arith.constant 0 : index
    %8 = vector.load %arg2[%c0_5, %c0_6] : memref<99x49xf32, #tpu.memory_space<vmem>>, vector<99x49xf32>
    %cst_7 = arith.constant dense<0.000000e+00> : vector<2x49xf32>
    %9 = tpu.matmul %7, %8, %cst_7 {dimension_numbers = #tpu.dot_dimension_numbers<[1], [0], [0], [1], [0, 0, 1, 1], [], []>} : vector<2x99xf32>, vector<99x49xf32>, vector<2x49xf32> -> vector<2x49xf32>
    %10 = arith.negf %9 : vector<2x49xf32>
    %11 = math.exp %10 : vector<2x49xf32>
    %cst_8 = arith.constant 1.000000e+00 : f32
    %12 = vector.broadcast %cst_8 : f32 to vector<2x49xf32>
    %13 = arith.addf %12, %11 : vector<2x49xf32>
    %14 = arith.divf %12, %13 : vector<2x49xf32>
    %15 = vector.shape_cast %14 : vector<2x49xf32> to vector<2x49x1xf32>
    %c0_9 = arith.constant 0 : index
    %c0_10 = arith.constant 0 : index
    %16 = vector.load %arg3[%c0_9, %c0_10] : memref<1x64xf32, #tpu.memory_space<vmem>>, vector<1x64xf32>
    %17 = vector.shape_cast %16 : vector<1x64xf32> to vector<1x1x64xf32>
    %cst_11 = arith.constant 1.000000e+00 : f32
    %18 = vector.broadcast %cst_11 : f32 to vector<2x49x1xf32>
    %19 = arith.subf %15, %18 : vector<2x49x1xf32>
    %20 = vector.broadcast %17 : vector<1x1x64xf32> to vector<2x49x64xf32>
    %21 = vector.broadcast %19 : vector<2x49x1xf32> to vector<2x49x64xf32>
    %22 = arith.mulf %20, %21 : vector<2x49x64xf32>
    %cst_12 = arith.constant 1.000000e+00 : f32
    %23 = vector.broadcast %cst_12 : f32 to vector<2x49x64xf32>
    %24 = arith.addf %23, %22 : vector<2x49x64xf32>
    %25 = arith.mulf %0, %24 : vector<2x49x64xf32>
    %cst_13 = arith.constant dense<0xFF800000> : vector<2x64xf32>
    %26 = vector.multi_reduction <maximumf>, %25, %cst_13 [1] : vector<2x49x64xf32> to vector<2x64xf32>
    %cst_14 = arith.constant dense<0.000000e+00> : vector<2x64xf32>
    %27 = vector.multi_reduction <add>, %25, %cst_14 [1] : vector<2x49x64xf32> to vector<2x64xf32>
    %cst_15 = arith.constant 4.900000e+01 : f32
    %28 = vector.broadcast %cst_15 : f32 to vector<2x64xf32>
    %29 = arith.divf %27, %28 : vector<2x64xf32>
    %30 = tpu.concatenate %26, %29 in 0 : vector<2x64xf32>, vector<2x64xf32> -> vector<4x64xf32>
    %c0_16 = arith.constant 0 : index
    %c0_17 = arith.constant 0 : index
    %31 = vector.load %arg4[%c0_16, %c0_17] : memref<64x4xf32, #tpu.memory_space<vmem>>, vector<64x4xf32>
    %cst_18 = arith.constant dense<0.000000e+00> : vector<4x4xf32>
    %32 = tpu.matmul %30, %31, %cst_18 {dimension_numbers = #tpu.dot_dimension_numbers<[1], [0], [0], [1], [0, 0, 1, 1], [], []>} : vector<4x64xf32>, vector<64x4xf32>, vector<4x4xf32> -> vector<4x4xf32>
    %cst_19 = arith.constant 0.000000e+00 : f32
    %33 = vector.broadcast %cst_19 : f32 to vector<4x4xf32>
    %34 = arith.maximumf %32, %33 : vector<4x4xf32>
    %35 = vector.extract_strided_slice %34 {offsets = [0, 0], sizes = [2, 4], strides = [1, 1]} : vector<4x4xf32> to vector<2x4xf32>
    %36 = vector.extract_strided_slice %34 {offsets = [2, 0], sizes = [2, 4], strides = [1, 1]} : vector<4x4xf32> to vector<2x4xf32>
    %37 = arith.addf %35, %36 : vector<2x4xf32>
    %c0_20 = arith.constant 0 : index
    %c0_21 = arith.constant 0 : index
    %38 = vector.load %arg5[%c0_20, %c0_21] : memref<4x64xf32, #tpu.memory_space<vmem>>, vector<4x64xf32>
    %cst_22 = arith.constant dense<0.000000e+00> : vector<2x64xf32>
    %39 = tpu.matmul %37, %38, %cst_22 {dimension_numbers = #tpu.dot_dimension_numbers<[1], [0], [0], [1], [0, 0, 1, 1], [], []>} : vector<2x4xf32>, vector<4x64xf32>, vector<2x64xf32> -> vector<2x64xf32>
    %40 = arith.negf %39 : vector<2x64xf32>
    %41 = math.exp %40 : vector<2x64xf32>
    %cst_23 = arith.constant 1.000000e+00 : f32
    %42 = vector.broadcast %cst_23 : f32 to vector<2x64xf32>
    %43 = arith.addf %42, %41 : vector<2x64xf32>
    %44 = arith.divf %42, %43 : vector<2x64xf32>
    %45 = vector.shape_cast %44 : vector<2x64xf32> to vector<2x1x64xf32>
    %46 = vector.broadcast %45 : vector<2x1x64xf32> to vector<2x49x64xf32>
    %47 = arith.mulf %25, %46 : vector<2x49x64xf32>
    %48 = arith.addf %47, %0 : vector<2x49x64xf32>
    %cst_24 = arith.constant dense<0.000000e+00> : vector<2x64xf32>
    %49 = vector.multi_reduction <add>, %0, %cst_24 [1] : vector<2x49x64xf32> to vector<2x64xf32>
    %cst_25 = arith.constant 4.900000e+01 : f32
    %50 = vector.broadcast %cst_25 : f32 to vector<2x64xf32>
    %51 = arith.divf %49, %50 : vector<2x64xf32>
    %cst_26 = arith.constant dense<0xFF800000> : vector<2x64xf32>
    %52 = vector.multi_reduction <maximumf>, %48, %cst_26 [1] : vector<2x49x64xf32> to vector<2x64xf32>
    %53 = arith.addf %52, %51 : vector<2x64xf32>
    %54 = tpu.concatenate %53, %51 in 1 : vector<2x64xf32>, vector<2x64xf32> -> vector<2x128xf32>
    %c0_27 = arith.constant 0 : index
    %c0_28 = arith.constant 0 : index
    %55 = vector.load %arg6[%c0_27, %c0_28] : memref<2x128xf32, #tpu.memory_space<vmem>>, vector<2x128xf32>
    tpu.vector_store %arg6[%c0_27, %c0_28], %54 {strides = array<i32>} : memref<2x128xf32, #tpu.memory_space<vmem>>, vector<2x128xf32>,
    return
  }
  func.func @transform_0(%arg0: i32) -> (i32, i32, i32) {
    %c0_i32 = arith.constant 0 : i32
    %c0_i32_0 = arith.constant 0 : i32
    %c0_i32_1 = arith.constant 0 : i32
    %c0_i32_2 = arith.constant 0 : i32
    return %c0_i32, %c0_i32_0, %c0_i32_1 : i32, i32, i32
  }
  func.func @transform_1(%arg0: i32) -> (i32, i32) {
    %c0_i32 = arith.constant 0 : i32
    %c0_i32_0 = arith.constant 0 : i32
    %c0_i32_1 = arith.constant 0 : i32
    return %c0_i32, %c0_i32_0 : i32, i32
  }
  func.func @transform_2(%arg0: i32) -> (i32, i32) {
    %c0_i32 = arith.constant 0 : i32
    %c0_i32_0 = arith.constant 0 : i32
    %c0_i32_1 = arith.constant 0 : i32
    return %c0_i32, %c0_i32_0 : i32, i32
  }
  func.func @transform_3(%arg0: i32) -> (i32, i32) {
    %c0_i32 = arith.constant 0 : i32
    %c0_i32_0 = arith.constant 0 : i32
    %c0_i32_1 = arith.constant 0 : i32
    return %c0_i32, %c0_i32_0 : i32, i32
  }
  func.func @transform_4(%arg0: i32) -> (i32, i32) {
    %c0_i32 = arith.constant 0 : i32
    %c0_i32_0 = arith.constant 0 : i32
    %c0_i32_1 = arith.constant 0 : i32
    return %c0_i32, %c0_i32_0 : i32, i32
  }
  func.func @transform_5(%arg0: i32) -> (i32, i32) {
    %c0_i32 = arith.constant 0 : i32
    %c0_i32_0 = arith.constant 0 : i32
    %c0_i32_1 = arith.constant 0 : i32
    return %c0_i32, %c0_i32_0 : i32, i32
  }
}

</mosaic_0001>

<llo_original>
// kernel: tpu_custom_call.1
$region0: #{tpu_custom_call.1}
  #allocation0 [shape = 'u32[]', space=smem, size = 0x4, offset = 0x4, fixed_abs, tag = 'smem constant byte address 0x4 - core index']
  #allocation1 [shape = 'u32[144,128]{1,0:T(1,128)}', space=vmem, size = 0x12000, scoped, tag = 'internal scratch']
  %s0 = inlined_call_operand.vmem [shape: f32[2,49,64], index: 0, kind: input, shape index: {}]
  %s1 = inlined_call_operand.vmem [shape: f32[99,49], index: 1, kind: input, shape index: {}]
  %s2 = inlined_call_operand.vmem [shape: f32[1,64], index: 2, kind: input, shape index: {}]
  %s3 = inlined_call_operand.vmem [shape: f32[64,4], index: 3, kind: input, shape index: {}]
  %s4 = inlined_call_operand.vmem [shape: f32[4,64], index: 4, kind: input, shape index: {}]
  %s5 = inlined_call_operand.hbm [shape: f32[2,128], index: 5, kind: output, shape index: {}]
  %s6 = sld [smem:[#allocation0]]
  $region30: #{tpu_custom_call.1} parent=0
    _
  %s8 = ssub.s32 1, %s6
  %s9 = scalar_select 0, %s8, %s6
  $region1: #{tpu_custom_call.1} parent=0
    #allocation2 [shape = 'u8[1024]{0}', space=vmem, size = 0x400, scoped, tag = 'output window, operand 0, single buffered']
    #allocation3 [shape = 's32[1]{0}', space=sflag, size = 0x4, scoped, tag = 'scoped memory for tpu_custom_call.1']
    %10 = vsyncpa [#allocation3], 0
    // Predicated region
    $region2: #{tpu_custom_call.1} parent=1 // pred_check
      _
    $region3: #{tpu_custom_call.1} parent=1 // pred_check_branch
      %12 = sbr.rel (0) target = $region5
    $region4: #{tpu_custom_call.1} parent=1 // pred_region
      _
    $region5: #{tpu_custom_call.1} parent=1 // pred_fallthru
      _
    // Predicated region
    $region6: #{tpu_custom_call.1} parent=1 // pred_check
      _
    $region7: #{tpu_custom_call.1} parent=1 // pred_check_branch
      %14 = sbr.rel (0) target = $region9
    $region8: #{tpu_custom_call.1} parent=1 // pred_region
      _
    $region9: #{tpu_custom_call.1} parent=1 // pred_fallthru
      _
    // Predicated region
    $region10: #{tpu_custom_call.1} parent=1 // pred_check
      _
    $region11: #{tpu_custom_call.1} parent=1 // pred_check_branch
      %16 = sbr.rel (0) target = $region13
    $region12: #{tpu_custom_call.1} parent=1 // pred_region
      _
    $region13: #{tpu_custom_call.1} parent=1 // pred_fallthru
      _
    // Predicated region
    $region14: #{tpu_custom_call.1} parent=1 // pred_check
      _
    $region15: #{tpu_custom_call.1} parent=1 // pred_check_branch
      %18 = sbr.rel (0) target = $region17
    $region16: #{tpu_custom_call.1} parent=1 // pred_region
      _
    $region17: #{tpu_custom_call.1} parent=1 // pred_fallthru
      _
    // Predicated region
    $region18: #{tpu_custom_call.1} parent=1 // pred_check
      _
    $region19: #{tpu_custom_call.1} parent=1 // pred_check_branch
      %20 = sbr.rel (0) target = $region21
    $region20: #{tpu_custom_call.1} parent=1 // pred_region
      _
    $region21: #{tpu_custom_call.1} parent=1 // pred_fallthru
      _
    %v21 = vld [vmem:[%s0] sm:$0xff]
    %v22 = vld [vmem:[%s0 + $0x8] sm:$0xff]
    %v23 = vld [vmem:[%s0 + $0x10] sm:$0xff]
    %v24 = vld [vmem:[%s0 + $0x18] sm:$0xff]
    %v25 = vld [vmem:[%s0 + $0x20] sm:$0xff]
    %v26 = vld [vmem:[%s0 + $0x28] sm:$0xff]
    %v27 = vld [vmem:[%s0 + $0x30] sm:$0x1]
    %v28 = vld [vmem:[%s0 + $0x38] sm:$0xff]
    %v29 = vld [vmem:[%s0 + $0x40] sm:$0xff]
    %v30 = vld [vmem:[%s0 + $0x48] sm:$0xff]
    %v31 = vld [vmem:[%s0 + $0x50] sm:$0xff]
    %v32 = vld [vmem:[%s0 + $0x58] sm:$0xff]
    %v33 = vld [vmem:[%s0 + $0x60] sm:$0xff]
    %v34 = vld [vmem:[%s0 + $0x68] sm:$0x1]
    %vm35 = vcmask 261120
    %v36 = vsel %vm35, %v21, -inf
    %37 = vmax.xlane.f32.xlu0 %v36
    %v38 = vpop.xlane.xlu0 %37
    %v39 = vsel %vm35, %v22, -inf
    %40 = vmax.xlane.f32.xlu0 %v39
    %v41 = vpop.xlane.xlu0 %40
    %v42 = vsel %vm35, %v23, -inf
    %43 = vmax.xlane.f32.xlu0 %v42
    %v44 = vpop.xlane.xlu0 %43
    %v45 = vsel %vm35, %v24, -inf
    %46 = vmax.xlane.f32.xlu0 %v45
    %v47 = vpop.xlane.xlu0 %46
    %v48 = vsel %vm35, %v25, -inf
    %49 = vmax.xlane.f32.xlu0 %v48
    %v50 = vpop.xlane.xlu0 %49
    %v51 = vsel %vm35, %v26, -inf
    %52 = vmax.xlane.f32.xlu0 %v51
    %v53 = vpop.xlane.xlu0 %52
    %vm54 = vcmask 253952
    %v55 = vsel %vm54, %v27, -inf
    %56 = vmax.xlane.f32.xlu0 %v55
    %v57 = vpop.xlane.xlu0 %56
    %v58 = vsel %vm35, %v28, -inf
    %59 = vmax.xlane.f32.xlu0 %v58
    %v60 = vpop.xlane.xlu0 %59
    %v61 = vsel %vm35, %v29, -inf
    %62 = vmax.xlane.f32.xlu0 %v61
    %v63 = vpop.xlane.xlu0 %62
    %v64 = vsel %vm35, %v30, -inf
    %65 = vmax.xlane.f32.xlu0 %v64
    %v66 = vpop.xlane.xlu0 %65
    %v67 = vsel %vm35, %v31, -inf
    %68 = vmax.xlane.f32.xlu0 %v67
    %v69 = vpop.xlane.xlu0 %68
    %v70 = vsel %vm35, %v32, -inf
    %71 = vmax.xlane.f32.xlu0 %v70
    %v72 = vpop.xlane.xlu0 %71
    %v73 = vsel %vm35, %v33, -inf
    %74 = vmax.xlane.f32.xlu0 %v73
    %v75 = vpop.xlane.xlu0 %74
    %v76 = vsel %vm54, %v34, -inf
    %77 = vmax.xlane.f32.xlu0 %v76
    %v78 = vpop.xlane.xlu0 %77
    %v79 = vsel %vm35, %v21, 0.0
    %80 = vadd.xlane.f32.xlu0 %v79
    %v81 = vpop.xlane.xlu0 %80
    %v82 = vsel %vm35, %v22, 0.0
    %83 = vadd.xlane.f32.xlu0 %v82
    %v84 = vpop.xlane.xlu0 %83
    %v85 = vsel %vm35, %v23, 0.0
    %86 = vadd.xlane.f32.xlu0 %v85
    %v87 = vpop.xlane.xlu0 %86
    %v88 = vsel %vm35, %v24, 0.0
    %89 = vadd.xlane.f32.xlu0 %v88
    %v90 = vpop.xlane.xlu0 %89
    %v91 = vsel %vm35, %v25, 0.0
    %92 = vadd.xlane.f32.xlu0 %v91
    %v93 = vpop.xlane.xlu0 %92
    %v94 = vsel %vm35, %v26, 0.0
    %95 = vadd.xlane.f32.xlu0 %v94
    %v96 = vpop.xlane.xlu0 %95
    %v97 = vsel %vm54, %v27, 0.0
    %98 = vadd.xlane.f32.xlu0 %v97
    %v99 = vpop.xlane.xlu0 %98
    %v100 = vsel %vm35, %v28, 0.0
    %101 = vadd.xlane.f32.xlu0 %v100
    %v102 = vpop.xlane.xlu0 %101
    %v103 = vsel %vm35, %v29, 0.0
    %104 = vadd.xlane.f32.xlu0 %v103
    %v105 = vpop.xlane.xlu0 %104
    %v106 = vsel %vm35, %v30, 0.0
    %107 = vadd.xlane.f32.xlu0 %v106
    %v108 = vpop.xlane.xlu0 %107
    %v109 = vsel %vm35, %v31, 0.0
    %110 = vadd.xlane.f32.xlu0 %v109
    %v111 = vpop.xlane.xlu0 %110
    %v112 = vsel %vm35, %v32, 0.0
    %113 = vadd.xlane.f32.xlu0 %v112
    %v114 = vpop.xlane.xlu0 %113
    %v115 = vsel %vm35, %v33, 0.0
    %116 = vadd.xlane.f32.xlu0 %v115
    %v117 = vpop.xlane.xlu0 %116
    %v118 = vsel %vm54, %v34, 0.0
    %119 = vadd.xlane.f32.xlu0 %v118
    %v120 = vpop.xlane.xlu0 %119
    %v121 = vrcp.pop 32.0
    %v122 = vmul.f32 %v81, %v121
    %v123 = vmul.f32 %v84, %v121
    %v124 = vmul.f32 %v87, %v121
    %v125 = vmul.f32 %v90, %v121
    %v126 = vmul.f32 %v93, %v121
    %v127 = vmul.f32 %v96, %v121
    %v128 = vmul.f32 %v99, %v121
    %v129 = vmul.f32 %v102, %v121
    %v130 = vmul.f32 %v105, %v121
    %v131 = vmul.f32 %v108, %v121
    %v132 = vmul.f32 %v111, %v121
    %v133 = vmul.f32 %v114, %v121
    %v134 = vmul.f32 %v117, %v121
    %v135 = vmul.f32 %v120, %v121
    %v150 = vlaneseq
    %v151 = vand.u32 %v150, 127
    %v152 = vlaneseq
    %v153 = vshrl.u32 %v152, 7
    %v154 = vsub.s32 %v151, %v153
    %v155 = vrot.slane %v38, %v154
    %v156 = vadd.s32 %v151, 4294967288
    %v157 = vlaneseq
    %v158 = vshrl.u32 %v157, 7
    %v159 = vsub.s32 %v156, %v158
    %v160 = vrot.slane %v41, %v159
    %vm161 = vcmask 130112
    %v162 = vsel %vm161, %v160, %v155
    %v163 = vadd.s32 %v151, 4294967280
    %v164 = vlaneseq
    %v165 = vshrl.u32 %v164, 7
    %v166 = vsub.s32 %v163, %v165
    %v167 = vrot.slane %v44, %v166
    %vm168 = vcmask 195712
    %v169 = vsel %vm168, %v167, %v162
    %v170 = vadd.s32 %v151, 4294967272
    %v171 = vlaneseq
    %v172 = vshrl.u32 %v171, 7
    %v173 = vsub.s32 %v170, %v172
    %v174 = vrot.slane %v47, %v173
    %vm175 = vcmask 261312
    %v176 = vsel %vm175, %v174, %v169
    %v177 = vadd.s32 %v151, 4294967264
    %v178 = vlaneseq
    %v179 = vshrl.u32 %v178, 7
    %v180 = vsub.s32 %v177, %v179
    %v181 = vrot.slane %v50, %v180
    %vm182 = vcmask 326912
    %v183 = vsel %vm182, %v181, %v176
    %v184 = vadd.s32 %v151, 4294967256
    %v185 = vlaneseq
    %v186 = vshrl.u32 %v185, 7
    %v187 = vsub.s32 %v184, %v186
    %v188 = vrot.slane %v53, %v187
    %vm189 = vcmask 392512
    %v190 = vsel %vm189, %v188, %v183
    %v191 = vadd.s32 %v151, 4294967248
    %v192 = vlaneseq
    %v193 = vshrl.u32 %v192, 7
    %v194 = vsub.s32 %v191, %v193
    %v195 = vrot.slane %v57, %v194
    %vm196 = vcmask 458112
    %v197 = vsel %vm196, %v195, %v190
    %v198 = vlaneseq
    %v199 = vshrl.u32 %v198, 7
    %v200 = vsub.s32 %v151, %v199
    %v201 = vrot.slane %v60, %v200
    %v202 = vlaneseq
    %v203 = vshrl.u32 %v202, 7
    %v204 = vsub.s32 %v156, %v203
    %v205 = vrot.slane %v63, %v204
    %v206 = vsel %vm161, %v205, %v201
    %v207 = vlaneseq
    %v208 = vshrl.u32 %v207, 7
    %v209 = vsub.s32 %v163, %v208
    %v210 = vrot.slane %v66, %v209
    %v211 = vsel %vm168, %v210, %v206
    %v212 = vlaneseq
    %v213 = vshrl.u32 %v212, 7
    %v214 = vsub.s32 %v170, %v213
    %v215 = vrot.slane %v69, %v214
    %v216 = vsel %vm175, %v215, %v211
    %v217 = vlaneseq
    %v218 = vshrl.u32 %v217, 7
    %v219 = vsub.s32 %v177, %v218
    %v220 = vrot.slane %v72, %v219
    %v221 = vsel %vm182, %v220, %v216
    %v222 = vlaneseq
    %v223 = vshrl.u32 %v222, 7
    %v224 = vsub.s32 %v184, %v223
    %v225 = vrot.slane %v75, %v224
    %v226 = vsel %vm189, %v225, %v221
    %v227 = vlaneseq
    %v228 = vshrl.u32 %v227, 7
    %v229 = vsub.s32 %v191, %v228
    %v230 = vrot.slane %v78, %v229
    %v231 = vsel %vm196, %v230, %v226
    %vm232 = vcmask 1041409
    %v233 = vsel %vm232, %v231, %v197
    %v249 = vadd.s32 %v151, 4294967247
    %v250 = vlaneseq
    %v251 = vshrl.u32 %v250, 7
    %v252 = vsub.s32 %v249, %v251
    %v253 = vrot.slane %v122, %v252
    %v254 = vadd.s32 %v151, 4294967239
    %v255 = vlaneseq
    %v256 = vshrl.u32 %v255, 7
    %v257 = vsub.s32 %v254, %v256
    %v258 = vrot.slane %v123, %v257
    %vm259 = vcmask 531912
    %v260 = vsel %vm259, %v258, %v253
    %v261 = vadd.s32 %v151, 4294967231
    %v262 = vlaneseq
    %v263 = vshrl.u32 %v262, 7
    %v264 = vsub.s32 %v261, %v263
    %v265 = vrot.slane %v124, %v264
    %vm266 = vcmask 597512
    %v267 = vsel %vm266, %v265, %v260
    %v268 = vadd.s32 %v151, 4294967223
    %v269 = vlaneseq
    %v270 = vshrl.u32 %v269, 7
    %v271 = vsub.s32 %v268, %v270
    %v272 = vrot.slane %v125, %v271
    %vm273 = vcmask 663112
    %v274 = vsel %vm273, %v272, %v267
    %v275 = vadd.s32 %v151, 4294967215
    %v276 = vlaneseq
    %v277 = vshrl.u32 %v276, 7
    %v278 = vsub.s32 %v275, %v277
    %v279 = vrot.slane %v126, %v278
    %vm280 = vcmask 728712
    %v281 = vsel %vm280, %v279, %v274
    %v282 = vadd.s32 %v151, 4294967207
    %v283 = vlaneseq
    %v284 = vshrl.u32 %v283, 7
    %v285 = vsub.s32 %v282, %v284
    %v286 = vrot.slane %v127, %v285
    %vm287 = vcmask 794312
    %v288 = vsel %vm287, %v286, %v281
    %v289 = vadd.s32 %v151, 4294967199
    %v290 = vlaneseq
    %v291 = vshrl.u32 %v290, 7
    %v292 = vsub.s32 %v289, %v291
    %v293 = vrot.slane %v128, %v292
    %vm294 = vcmask 859912
    %v295 = vsel %vm294, %v293, %v288
    %v296 = vlaneseq
    %v297 = vshrl.u32 %v296, 7
    %v298 = vsub.s32 %v249, %v297
    %v299 = vrot.slane %v129, %v298
    %v300 = vlaneseq
    %v301 = vshrl.u32 %v300, 7
    %v302 = vsub.s32 %v254, %v301
    %v303 = vrot.slane %v130, %v302
    %v304 = vsel %vm259, %v303, %v299
    %v305 = vlaneseq
    %v306 = vshrl.u32 %v305, 7
    %v307 = vsub.s32 %v261, %v306
    %v308 = vrot.slane %v131, %v307
    %v309 = vsel %vm266, %v308, %v304
    %v310 = vlaneseq
    %v311 = vshrl.u32 %v310, 7
    %v312 = vsub.s32 %v268, %v311
    %v313 = vrot.slane %v132, %v312
    %v314 = vsel %vm273, %v313, %v309
    %v315 = vlaneseq
    %v316 = vshrl.u32 %v315, 7
    %v317 = vsub.s32 %v275, %v316
    %v318 = vrot.slane %v133, %v317
    %v319 = vsel %vm280, %v318, %v314
    %v320 = vlaneseq
    %v321 = vshrl.u32 %v320, 7
    %v322 = vsub.s32 %v282, %v321
    %v323 = vrot.slane %v134, %v322
    %v324 = vsel %vm287, %v323, %v319
    %v325 = vlaneseq
    %v326 = vshrl.u32 %v325, 7
    %v327 = vsub.s32 %v289, %v326
    %v328 = vrot.slane %v135, %v327
    %v329 = vsel %vm294, %v328, %v324
    %v330 = vsel %vm232, %v329, %v295
    %vm332 = vcmask 400384
    %v333 = vsel %vm332, %v233, %v330
    %vm334 = vcmask 801792
    %v335 = vsel %vm334, %v333, 1.0
    %v336 = vld [vmem:[%s1] sm:$0xff]
    %v337 = vld [vmem:[%s1 + $0x8] sm:$0xff]
    %v338 = vld [vmem:[%s1 + $0x10] sm:$0xff]
    %v339 = vld [vmem:[%s1 + $0x18] sm:$0xff]
    %v340 = vld [vmem:[%s1 + $0x20] sm:$0xff]
    %v341 = vld [vmem:[%s1 + $0x28] sm:$0xff]
    %v342 = vld [vmem:[%s1 + $0x30] sm:$0xff]
    %v343 = vld [vmem:[%s1 + $0x38] sm:$0xff]
    %v344 = vld [vmem:[%s1 + $0x40] sm:$0xff]
    %v345 = vld [vmem:[%s1 + $0x48] sm:$0xff]
    %v346 = vld [vmem:[%s1 + $0x50] sm:$0xff]
    %v347 = vld [vmem:[%s1 + $0x58] sm:$0xff]
    %v348 = vld [vmem:[%s1 + $0x60] sm:$0x7]
    %vm349 = vcmask 809984
    %v351 = vsel %vm349, %v335, 0
    %vm353 = vcmask 1042432
    %v355 = vsel %vm353, %v348, 0
    %357 = vmatprep.subr.mxu0 0.0
    %358 = vmatpush1.msra.mxu0 %v336
    %359 = vmatprep.subr.mxu0 0.0
    %360 = vmatpush1.msra.mxu0 %v337
    %361 = vmatprep.subr.mxu0 0.0
    %362 = vmatpush1.msra.mxu0 %v338
    %363 = vmatprep.subr.mxu0 0.0
    %364 = vmatpush1.msra.mxu0 %v339
    %365 = vmatprep.subr.mxu0 0.0
    %366 = vmatpush1.msra.mxu0 %v340
    %367 = vmatprep.subr.mxu0 0.0
    %368 = vmatpush1.msra.mxu0 %v341
    %369 = vmatprep.subr.mxu0 0.0
    %370 = vmatpush1.msra.mxu0 %v342
    %371 = vmatprep.subr.mxu0 0.0
    %372 = vmatpush1.msra.mxu0 %v343
    %373 = vmatprep.subr.mxu0 0.0
    %374 = vmatpush1.msra.mxu0 %v344
    %375 = vmatprep.subr.mxu0 0.0
    %376 = vmatpush1.msra.mxu0 %v345
    %377 = vmatprep.subr.mxu0 0.0
    %378 = vmatpush1.msra.mxu0 %v346
    %379 = vmatprep.subr.mxu0 0.0
    %380 = vmatpush1.msra.mxu0 %v347
    %381 = vmatprep.subr.mxu0 0.0
    %382 = vmatpush1.msra.mxu0 %v355
    %383 = vmatprep.subr.mxu0 0.0
    %384 = vmatpush1.msra.mxu0 0.0
    %385 = vmatprep.subr.mxu0 0.0
    %386 = vmatpush1.msra.mxu0 0.0
    %387 = vmatprep.subr.mxu0 0.0
    %388 = vmatpush1.msra.mxu0 0.0
    %389 = vmatprep.subr.mxu0 0.0
    %390 = vmatpush1.msra.mxu0 0.0
    %391 = vmatprep.subr.mxu0 0.0
    %392 = vmatpush1.msra.mxu0 0.0
    %393 = vmatprep.subr.mxu0 0.0
    %394 = vmatpush1.msra.mxu0 0.0
    %395 = vmatprep.subr.mxu0 0.0
    %396 = vmatpush1.msra.mxu0 0.0
    %397 = vmatprep.subr.mxu0 0.0
    %398 = vmatpush1.msra.mxu0 0.0
    %399 = vmatprep.subr.mxu0 0.0
    %400 = vmatpush1.msra.mxu0 0.0
    %401 = vmatprep.subr.mxu0 0.0
    %402 = vmatpush1.msra.mxu0 0.0
    %403 = vmatprep.subr.mxu0 0.0
    %404 = vmatpush1.msra.mxu0 0.0
    %405 = vmatprep.subr.mxu0 0.0
    %406 = vmatpush1.msra.mxu0 0.0
    %407 = vmatprep.subr.mxu0 0.0
    %408 = vmatpush1.msra.mxu0 0.0
    %409 = vmatprep.subr.mxu0 0.0
    %410 = vmatpush1.msra.mxu0 0.0
    %411 = vmatprep.subr.mxu0 0.0
    %412 = vmatpush1.msra.mxu0 0.0
    %413 = vmatprep.subr.mxu0 0.0
    %414 = vmatpush1.msra.mxu0 0.0
    %415 = vmatprep.subr.mxu0 0.0
    %416 = vmatpush1.msra.mxu0 0.0
    %417 = vmatprep.subr.mxu0 0.0
    %418 = vmatpush1.msra.mxu0 0.0
    %419 = vmatprep.subr.mxu0 0.0
    %420 = vmatpush1.msra.mxu0 0.0
    %421 = vmatprep.mubr.f32.mxu0 0.0
    %422 = vmatmul.mubr.f32.gmra.mrb[0].mxu0 %v351
    %v423 = vpop.f32.mrb[0].mxu0
    %v424 = vadd.f32 0.0, %v423
    %v425 = vpop.f32.mrb[0].mxu0
    %426 = vdwg.mxu0
    %v427 = vxor.u32 %v424, 2147483648
    %v428 = vmul.f32 %v427, 1.442695
    %v429 = vpow.pop %v428
    %v430 = vadd.f32 %v429, 1.0
    %v431 = vrcp.pop %v430
    %v432 = vmul.f32 1.0, %v431
    %v433 = vlaneseq
    %v434 = vshrl.u32 %v433, 7
    %v435 = vsub.s32 0, %v434
    %v436 = vrot.slane %v432, %v435
    %438 = vbcast.lane.b32.xlu0 %v436, 256
    %v439 = vpop.permute.xlu0 %438
    %s441 = sor.u32 256, 8
    %442 = vbcast.lane.b32.xlu0 %v436, %s441
    %v443 = vpop.permute.xlu0 %442
    %s445 = sor.u32 256, 16
    %446 = vbcast.lane.b32.xlu0 %v436, %s445
    %v447 = vpop.permute.xlu0 %446
    %s449 = sor.u32 256, 24
    %450 = vbcast.lane.b32.xlu0 %v436, %s449
    %v451 = vpop.permute.xlu0 %450
    %s453 = sor.u32 256, 32
    %454 = vbcast.lane.b32.xlu0 %v436, %s453
    %v455 = vpop.permute.xlu0 %454
    %s457 = sor.u32 256, 40
    %458 = vbcast.lane.b32.xlu0 %v436, %s457
    %v459 = vpop.permute.xlu0 %458
    %s461 = sor.u32 256, 48
    %462 = vbcast.lane.b32.xlu0 %v436, %s461
    %v463 = vpop.permute.xlu0 %462
    %v464 = vlaneseq
    %v465 = vshrl.u32 %v464, 7
    %v466 = vsub.s32 1, %v465
    %v467 = vrot.slane %v432, %v466
    %469 = vbcast.lane.b32.xlu0 %v467, 256
    %v470 = vpop.permute.xlu0 %469
    %s472 = sor.u32 256, 8
    %473 = vbcast.lane.b32.xlu0 %v467, %s472
    %v474 = vpop.permute.xlu0 %473
    %s476 = sor.u32 256, 16
    %477 = vbcast.lane.b32.xlu0 %v467, %s476
    %v478 = vpop.permute.xlu0 %477
    %s480 = sor.u32 256, 24
    %481 = vbcast.lane.b32.xlu0 %v467, %s480
    %v482 = vpop.permute.xlu0 %481
    %s484 = sor.u32 256, 32
    %485 = vbcast.lane.b32.xlu0 %v467, %s484
    %v486 = vpop.permute.xlu0 %485
    %s488 = sor.u32 256, 40
    %489 = vbcast.lane.b32.xlu0 %v467, %s488
    %v490 = vpop.permute.xlu0 %489
    %s492 = sor.u32 256, 48
    %493 = vbcast.lane.b32.xlu0 %v467, %s492
    %v494 = vpop.permute.xlu0 %493
    %v495 = vld [vmem:[%s2] sm:$0x1]
    %v496 = vsub.f32 %v439, 1.0
    %v497 = vsub.f32 %v443, 1.0
    %v498 = vsub.f32 %v447, 1.0
    %v499 = vsub.f32 %v451, 1.0
    %v500 = vsub.f32 %v455, 1.0
    %v501 = vsub.f32 %v459, 1.0
    %v502 = vsub.f32 %v463, 1.0
    %v503 = vsub.f32 %v470, 1.0
    %v504 = vsub.f32 %v474, 1.0
    %v505 = vsub.f32 %v478, 1.0
    %v506 = vsub.f32 %v482, 1.0
    %v507 = vsub.f32 %v486, 1.0
    %v508 = vsub.f32 %v490, 1.0
    %v509 = vsub.f32 %v494, 1.0
    %v511 = vlaneseq
    %v512 = vshrl.u32 %v511, 7
    %v513 = vsub.s32 0, %v512
    %v514 = vrot.slane %v495, %v513
    %v516 = vmul.f32 %v514, %v496
    %v517 = vmul.f32 %v514, %v497
    %v518 = vmul.f32 %v514, %v498
    %v519 = vmul.f32 %v514, %v499
    %v520 = vmul.f32 %v514, %v500
    %v521 = vmul.f32 %v514, %v501
    %v522 = vmul.f32 %v514, %v502
    %v523 = vmul.f32 %v514, %v503
    %v524 = vmul.f32 %v514, %v504
    %v525 = vmul.f32 %v514, %v505
    %v526 = vmul.f32 %v514, %v506
    %v527 = vmul.f32 %v514, %v507
    %v528 = vmul.f32 %v514, %v508
    %v529 = vmul.f32 %v514, %v509
    %v530 = vadd.f32 %v516, 1.0
    %v531 = vadd.f32 %v517, 1.0
    %v532 = vadd.f32 %v518, 1.0
    %v533 = vadd.f32 %v519, 1.0
    %v534 = vadd.f32 %v520, 1.0
    %v535 = vadd.f32 %v521, 1.0
    %v536 = vadd.f32 %v522, 1.0
    %v537 = vadd.f32 %v523, 1.0
    %v538 = vadd.f32 %v524, 1.0
    %v539 = vadd.f32 %v525, 1.0
    %v540 = vadd.f32 %v526, 1.0
    %v541 = vadd.f32 %v527, 1.0
    %v542 = vadd.f32 %v528, 1.0
    %v543 = vadd.f32 %v529, 1.0
    %v544 = vmul.f32 %v21, %v530
    %v545 = vmul.f32 %v22, %v531
    %v546 = vmul.f32 %v23, %v532
    %v547 = vmul.f32 %v24, %v533
    %v548 = vmul.f32 %v25, %v534
    %v549 = vmul.f32 %v26, %v535
    %v550 = vmul.f32 %v27, %v536
    %v551 = vmul.f32 %v28, %v537
    %v552 = vmul.f32 %v29, %v538
    %v553 = vmul.f32 %v30, %v539
    %v554 = vmul.f32 %v31, %v540
    %v555 = vmul.f32 %v32, %v541
    %v556 = vmul.f32 %v33, %v542
    %v557 = vmul.f32 %v34, %v543
    %vm558 = vcmask 523264
    %v559 = vsel %vm558, %v544, -inf
    %v560 = vsel %vm558, %v545, -inf
    %v561 = vsel %vm558, %v546, -inf
    %v562 = vmax.f32 %v559, %v561
    %v563 = vsel %vm558, %v547, -inf
    %v564 = vmax.f32 %v560, %v563
    %v565 = vsel %vm558, %v548, -inf
    %v566 = vmax.f32 %v562, %v565
    %v567 = vsel %vm558, %v549, -inf
    %v568 = vmax.f32 %v564, %v567
    %vm569 = vcmask 516096
    %v570 = vsel %vm569, %v550, -inf
    %v571 = vmax.f32 %v566, %v570
    %v572 = vmax.f32 %v571, %v568
    %v573 = vrot.slane %v572, 4
    %v574 = vmax.f32 %v572, %v573
    %v575 = vrot.slane %v574, 2
    %v576 = vmax.f32 %v574, %v575
    %v577 = vrot.slane %v576, 1
    %v578 = vmax.f32 %v576, %v577
    %v579 = vsel %vm558, %v551, -inf
    %v580 = vsel %vm558, %v552, -inf
    %v581 = vsel %vm558, %v553, -inf
    %v582 = vmax.f32 %v579, %v581
    %v583 = vsel %vm558, %v554, -inf
    %v584 = vmax.f32 %v580, %v583
    %v585 = vsel %vm558, %v555, -inf
    %v586 = vmax.f32 %v582, %v585
    %v587 = vsel %vm558, %v556, -inf
    %v588 = vmax.f32 %v584, %v587
    %v589 = vsel %vm569, %v557, -inf
    %v590 = vmax.f32 %v586, %v589
    %v591 = vmax.f32 %v590, %v588
    %v592 = vrot.slane %v591, 4
    %v593 = vmax.f32 %v591, %v592
    %v594 = vrot.slane %v593, 2
    %v595 = vmax.f32 %v593, %v594
    %v596 = vrot.slane %v595, 1
    %v597 = vmax.f32 %v595, %v596
    %v598 = vsel %vm558, %v544, 0.0
    %v599 = vsel %vm558, %v545, 0.0
    %v600 = vadd.f32 %v598, %v599
    %v601 = vsel %vm558, %v546, 0.0
    %v602 = vadd.f32 %v600, %v601
    %v603 = vsel %vm558, %v547, 0.0
    %v604 = vadd.f32 %v602, %v603
    %v605 = vsel %vm558, %v548, 0.0
    %v606 = vadd.f32 %v604, %v605
    %v607 = vsel %vm558, %v549, 0.0
    %v608 = vadd.f32 %v606, %v607
    %v609 = vsel %vm569, %v550, 0.0
    %v610 = vadd.f32 %v608, %v609
    %v611 = vrot.slane %v610, 4
    %v612 = vadd.f32 %v610, %v611
    %v613 = vrot.slane %v612, 2
    %v614 = vadd.f32 %v612, %v613
    %v615 = vrot.slane %v614, 1
    %v616 = vadd.f32 %v614, %v615
    %v617 = vsel %vm558, %v551, 0.0
    %v618 = vsel %vm558, %v552, 0.0
    %v619 = vadd.f32 %v617, %v618
    %v620 = vsel %vm558, %v553, 0.0
    %v621 = vadd.f32 %v619, %v620
    %v622 = vsel %vm558, %v554, 0.0
    %v623 = vadd.f32 %v621, %v622
    %v624 = vsel %vm558, %v555, 0.0
    %v625 = vadd.f32 %v623, %v624
    %v626 = vsel %vm558, %v556, 0.0
    %v627 = vadd.f32 %v625, %v626
    %v628 = vsel %vm569, %v557, 0.0
    %v629 = vadd.f32 %v627, %v628
    %v630 = vrot.slane %v629, 4
    %v631 = vadd.f32 %v629, %v630
    %v632 = vrot.slane %v631, 2
    %v633 = vadd.f32 %v631, %v632
    %v634 = vrot.slane %v633, 1
    %v635 = vadd.f32 %v633, %v634
    %v636 = vrcp.pop 49.0
    %v637 = vmul.f32 %v616, %v636
    %v638 = vmul.f32 %v635, %v636
    %v641 = vsel %vm232, %v597, %v578
    %vm645 = vcmask 1043459
    %v646 = vsel %vm645, %v638, %v637
    %vm648 = vcmask 1041408
    %v649 = vsel %vm648, %v641, %v646
    %v650 = vld [vmem:[%s3] sm:$0xff]
    %v651 = vld [vmem:[%s3 + $0x8] sm:$0xff]
    %v652 = vld [vmem:[%s3 + $0x10] sm:$0xff]
    %v653 = vld [vmem:[%s3 + $0x18] sm:$0xff]
    %v654 = vld [vmem:[%s3 + $0x20] sm:$0xff]
    %v655 = vld [vmem:[%s3 + $0x28] sm:$0xff]
    %v656 = vld [vmem:[%s3 + $0x30] sm:$0xff]
    %v657 = vld [vmem:[%s3 + $0x38] sm:$0xff]
    %v659 = vsel %vm558, %v649, 0
    %661 = vmatprep.subr.mxu0 0.0
    %662 = vmatpush1.msra.mxu0 %v650
    %663 = vmatprep.subr.mxu0 0.0
    %664 = vmatpush1.msra.mxu0 %v651
    %665 = vmatprep.subr.mxu0 0.0
    %666 = vmatpush1.msra.mxu0 %v652
    %667 = vmatprep.subr.mxu0 0.0
    %668 = vmatpush1.msra.mxu0 %v653
    %669 = vmatprep.subr.mxu0 0.0
    %670 = vmatpush1.msra.mxu0 %v654
    %671 = vmatprep.subr.mxu0 0.0
    %672 = vmatpush1.msra.mxu0 %v655
    %673 = vmatprep.subr.mxu0 0.0
    %674 = vmatpush1.msra.mxu0 %v656
    %675 = vmatprep.subr.mxu0 0.0
    %676 = vmatpush1.msra.mxu0 %v657
    %677 = vmatprep.subr.mxu0 0.0
    %678 = vmatpush1.msra.mxu0 0.0
    %679 = vmatprep.subr.mxu0 0.0
    %680 = vmatpush1.msra.mxu0 0.0
    %681 = vmatprep.subr.mxu0 0.0
    %682 = vmatpush1.msra.mxu0 0.0
    %683 = vmatprep.subr.mxu0 0.0
    %684 = vmatpush1.msra.mxu0 0.0
    %685 = vmatprep.subr.mxu0 0.0
    %686 = vmatpush1.msra.mxu0 0.0
    %687 = vmatprep.subr.mxu0 0.0
    %688 = vmatpush1.msra.mxu0 0.0
    %689 = vmatprep.subr.mxu0 0.0
    %690 = vmatpush1.msra.mxu0 0.0
    %691 = vmatprep.subr.mxu0 0.0
    %692 = vmatpush1.msra.mxu0 0.0
    %693 = vmatprep.subr.mxu0 0.0
    %694 = vmatpush1.msra.mxu0 0.0
    %695 = vmatprep.subr.mxu0 0.0
    %696 = vmatpush1.msra.mxu0 0.0
    %697 = vmatprep.subr.mxu0 0.0
    %698 = vmatpush1.msra.mxu0 0.0
    %699 = vmatprep.subr.mxu0 0.0
    %700 = vmatpush1.msra.mxu0 0.0
    %701 = vmatprep.subr.mxu0 0.0
    %702 = vmatpush1.msra.mxu0 0.0
    %703 = vmatprep.subr.mxu0 0.0
    %704 = vmatpush1.msra.mxu0 0.0
    %705 = vmatprep.subr.mxu0 0.0
    %706 = vmatpush1.msra.mxu0 0.0
    %707 = vmatprep.subr.mxu0 0.0
    %708 = vmatpush1.msra.mxu0 0.0
    %709 = vmatprep.subr.mxu0 0.0
    %710 = vmatpush1.msra.mxu0 0.0
    %711 = vmatprep.subr.mxu0 0.0
    %712 = vmatpush1.msra.mxu0 0.0
    %713 = vmatprep.subr.mxu0 0.0
    %714 = vmatpush1.msra.mxu0 0.0
    %715 = vmatprep.subr.mxu0 0.0
    %716 = vmatpush1.msra.mxu0 0.0
    %717 = vmatprep.subr.mxu0 0.0
    %718 = vmatpush1.msra.mxu0 0.0
    %719 = vmatprep.subr.mxu0 0.0
    %720 = vmatpush1.msra.mxu0 0.0
    %721 = vmatprep.subr.mxu0 0.0
    %722 = vmatpush1.msra.mxu0 0.0
    %723 = vmatprep.subr.mxu0 0.0
    %724 = vmatpush1.msra.mxu0 0.0
    %725 = vmatprep.mubr.f32.mxu0 0.0
    %726 = vmatmul.mubr.f32.gmra.mrb[0].mxu0 %v659
    %v727 = vpop.f32.mrb[0].mxu0
    %v728 = vadd.f32 0.0, %v727
    %v729 = vpop.f32.mrb[0].mxu0
    %730 = vdwg.mxu0
    %v731 = vmax.f32 %v728, 0.0
    %v733 = vrot.slane %v731, 2
    %v735 = vadd.f32 %v731, %v733
    %v736 = vld [vmem:[%s4] sm:$0xf]
    %vm737 = vcmask 31744
    %v739 = vsel %vm737, %v735, 0
    %vm741 = vcmask 1043456
    %v743 = vsel %vm741, %v736, 0
    %745 = vmatprep.subr.mxu0 0.0
    %746 = vmatpush1.msra.mxu0 %v743
    %747 = vmatprep.subr.mxu0 0.0
    %748 = vmatpush1.msra.mxu0 0.0
    %749 = vmatprep.subr.mxu0 0.0
    %750 = vmatpush1.msra.mxu0 0.0
    %751 = vmatprep.subr.mxu0 0.0
    %752 = vmatpush1.msra.mxu0 0.0
    %753 = vmatprep.subr.mxu0 0.0
    %754 = vmatpush1.msra.mxu0 0.0
    %755 = vmatprep.subr.mxu0 0.0
    %756 = vmatpush1.msra.mxu0 0.0
    %757 = vmatprep.subr.mxu0 0.0
    %758 = vmatpush1.msra.mxu0 0.0
    %759 = vmatprep.subr.mxu0 0.0
    %760 = vmatpush1.msra.mxu0 0.0
    %761 = vmatprep.subr.mxu0 0.0
    %762 = vmatpush1.msra.mxu0 0.0
    %763 = vmatprep.subr.mxu0 0.0
    %764 = vmatpush1.msra.mxu0 0.0
    %765 = vmatprep.subr.mxu0 0.0
    %766 = vmatpush1.msra.mxu0 0.0
    %767 = vmatprep.subr.mxu0 0.0
    %768 = vmatpush1.msra.mxu0 0.0
    %769 = vmatprep.subr.mxu0 0.0
    %770 = vmatpush1.msra.mxu0 0.0
    %771 = vmatprep.subr.mxu0 0.0
    %772 = vmatpush1.msra.mxu0 0.0
    %773 = vmatprep.subr.mxu0 0.0
    %774 = vmatpush1.msra.mxu0 0.0
    %775 = vmatprep.subr.mxu0 0.0
    %776 = vmatpush1.msra.mxu0 0.0
    %777 = vmatprep.subr.mxu0 0.0
    %778 = vmatpush1.msra.mxu0 0.0
    %779 = vmatprep.subr.mxu0 0.0
    %780 = vmatpush1.msra.mxu0 0.0
    %781 = vmatprep.subr.mxu0 0.0
    %782 = vmatpush1.msra.mxu0 0.0
    %783 = vmatprep.subr.mxu0 0.0
    %784 = vmatpush1.msra.mxu0 0.0
    %785 = vmatprep.subr.mxu0 0.0
    %786 = vmatpush1.msra.mxu0 0.0
    %787 = vmatprep.subr.mxu0 0.0
    %788 = vmatpush1.msra.mxu0 0.0
    %789 = vmatprep.subr.mxu0 0.0
    %790 = vmatpush1.msra.mxu0 0.0
    %791 = vmatprep.subr.mxu0 0.0
    %792 = vmatpush1.msra.mxu0 0.0
    %793 = vmatprep.subr.mxu0 0.0
    %794 = vmatpush1.msra.mxu0 0.0
    %795 = vmatprep.subr.mxu0 0.0
    %796 = vmatpush1.msra.mxu0 0.0
    %797 = vmatprep.subr.mxu0 0.0
    %798 = vmatpush1.msra.mxu0 0.0
    %799 = vmatprep.subr.mxu0 0.0
    %800 = vmatpush1.msra.mxu0 0.0
    %801 = vmatprep.subr.mxu0 0.0
    %802 = vmatpush1.msra.mxu0 0.0
    %803 = vmatprep.subr.mxu0 0.0
    %804 = vmatpush1.msra.mxu0 0.0
    %805 = vmatprep.subr.mxu0 0.0
    %806 = vmatpush1.msra.mxu0 0.0
    %807 = vmatprep.subr.mxu0 0.0
    %808 = vmatpush1.msra.mxu0 0.0
    %809 = vmatprep.mubr.f32.mxu0 0.0
    %810 = vmatmul.mubr.f32.gmra.mrb[0].mxu0 %v739
    %v811 = vpop.f32.mrb[0].mxu0
    %v812 = vadd.f32 0.0, %v811
    %v813 = vpop.f32.mrb[0].mxu0
    %814 = vdwg.mxu0
    %v815 = vxor.u32 %v812, 2147483648
    %v816 = vmul.f32 %v815, 1.442695
    %v817 = vpow.pop %v816
    %v818 = vadd.f32 %v817, 1.0
    %v819 = vrcp.pop %v818
    %v820 = vmul.f32 1.0, %v819
    %v823 = vunpack.c.l.s4 1966171168
    %v824 = vunpack.c.0.s8 %v823
    %v825 = vlaneseq
    %v826 = vshrl.u32 %v825, 7
    %v827 = vsub.s32 %v824, %v826
    %v828 = vrot.slane %v820, %v827
    %v829 = vcombine.high %v828, %v828
    %v831 = vunpack.c.l.s4 1966171168
    %v832 = vunpack.c.0.s8 %v831
    %v833 = vlaneseq
    %v834 = vshrl.u32 %v833, 7
    %v835 = vsub.s32 %v832, %v834
    %v836 = vrot.slane %v828, %v835
    %v838 = vunpack.c.l.s4 1966171168
    %v839 = vunpack.c.0.s8 %v838
    %v840 = vlaneseq
    %v841 = vshrl.u32 %v840, 7
    %v842 = vsub.s32 %v839, %v841
    %v843 = vrot.slane %v829, %v842
    %v844 = vlaneseq
    %v845 = vshrl.u32 %v844, 7
    %v846 = vsub.s32 0, %v845
    %v847 = vrot.slane %v836, %v846
    %v848 = vlaneseq
    %v849 = vshrl.u32 %v848, 7
    %v850 = vsub.s32 0, %v849
    %v851 = vrot.slane %v843, %v850
    %v854 = vmul.f32 %v544, %v847
    %v855 = vmul.f32 %v545, %v847
    %v856 = vmul.f32 %v546, %v847
    %v857 = vmul.f32 %v547, %v847
    %v858 = vmul.f32 %v548, %v847
    %v859 = vmul.f32 %v549, %v847
    %v860 = vmul.f32 %v550, %v847
    %v861 = vmul.f32 %v551, %v851
    %v862 = vmul.f32 %v552, %v851
    %v863 = vmul.f32 %v553, %v851
    %v864 = vmul.f32 %v554, %v851
    %v865 = vmul.f32 %v555, %v851
    %v866 = vmul.f32 %v556, %v851
    %v867 = vmul.f32 %v557, %v851
    %v868 = vadd.f32 %v854, %v21
    %v869 = vadd.f32 %v855, %v22
    %v870 = vadd.f32 %v856, %v23
    %v871 = vadd.f32 %v857, %v24
    %v872 = vadd.f32 %v858, %v25
    %v873 = vadd.f32 %v859, %v26
    %v874 = vadd.f32 %v860, %v27
    %v875 = vadd.f32 %v861, %v28
    %v876 = vadd.f32 %v862, %v29
    %v877 = vadd.f32 %v863, %v30
    %v878 = vadd.f32 %v864, %v31
    %v879 = vadd.f32 %v865, %v32
    %v880 = vadd.f32 %v866, %v33
    %v881 = vadd.f32 %v867, %v34
    %v882 = vsel %vm558, %v21, 0.0
    %v883 = vsel %vm558, %v22, 0.0
    %v884 = vadd.f32 %v882, %v883
    %v885 = vsel %vm558, %v23, 0.0
    %v886 = vadd.f32 %v884, %v885
    %v887 = vsel %vm558, %v24, 0.0
    %v888 = vadd.f32 %v886, %v887
    %v889 = vsel %vm558, %v25, 0.0
    %v890 = vadd.f32 %v888, %v889
    %v891 = vsel %vm558, %v26, 0.0
    %v892 = vadd.f32 %v890, %v891
    %v893 = vsel %vm569, %v27, 0.0
    %v894 = vadd.f32 %v892, %v893
    %v895 = vrot.slane %v894, 4
    %v896 = vadd.f32 %v894, %v895
    %v897 = vrot.slane %v896, 2
    %v898 = vadd.f32 %v896, %v897
    %v899 = vrot.slane %v898, 1
    %v900 = vadd.f32 %v898, %v899
    %v901 = vsel %vm558, %v28, 0.0
    %v902 = vsel %vm558, %v29, 0.0
    %v903 = vadd.f32 %v901, %v902
    %v904 = vsel %vm558, %v30, 0.0
    %v905 = vadd.f32 %v903, %v904
    %v906 = vsel %vm558, %v31, 0.0
    %v907 = vadd.f32 %v905, %v906
    %v908 = vsel %vm558, %v32, 0.0
    %v909 = vadd.f32 %v907, %v908
    %v910 = vsel %vm558, %v33, 0.0
    %v911 = vadd.f32 %v909, %v910
    %v912 = vsel %vm569, %v34, 0.0
    %v913 = vadd.f32 %v911, %v912
    %v914 = vrot.slane %v913, 4
    %v915 = vadd.f32 %v913, %v914
    %v916 = vrot.slane %v915, 2
    %v917 = vadd.f32 %v915, %v916
    %v918 = vrot.slane %v917, 1
    %v919 = vadd.f32 %v917, %v918
    %v920 = vmul.f32 %v900, %v636
    %v921 = vmul.f32 %v919, %v636
    %v922 = vsel %vm558, %v868, -inf
    %v923 = vsel %vm558, %v869, -inf
    %v924 = vsel %vm558, %v870, -inf
    %v925 = vmax.f32 %v922, %v924
    %v926 = vsel %vm558, %v871, -inf
    %v927 = vmax.f32 %v923, %v926
    %v928 = vsel %vm558, %v872, -inf
    %v929 = vmax.f32 %v925, %v928
    %v930 = vsel %vm558, %v873, -inf
    %v931 = vmax.f32 %v927, %v930
    %v932 = vsel %vm569, %v874, -inf
    %v933 = vmax.f32 %v929, %v932
    %v934 = vmax.f32 %v933, %v931
    %v935 = vrot.slane %v934, 4
    %v936 = vmax.f32 %v934, %v935
    %v937 = vrot.slane %v936, 2
    %v938 = vmax.f32 %v936, %v937
    %v939 = vrot.slane %v938, 1
    %v940 = vmax.f32 %v938, %v939
    %v941 = vsel %vm558, %v875, -inf
    %v942 = vsel %vm558, %v876, -inf
    %v943 = vsel %vm558, %v877, -inf
    %v944 = vmax.f32 %v941, %v943
    %v945 = vsel %vm558, %v878, -inf
    %v946 = vmax.f32 %v942, %v945
    %v947 = vsel %vm558, %v879, -inf
    %v948 = vmax.f32 %v944, %v947
    %v949 = vsel %vm558, %v880, -inf
    %v950 = vmax.f32 %v946, %v949
    %v951 = vsel %vm569, %v881, -inf
    %v952 = vmax.f32 %v948, %v951
    %v953 = vmax.f32 %v952, %v950
    %v954 = vrot.slane %v953, 4
    %v955 = vmax.f32 %v953, %v954
    %v956 = vrot.slane %v955, 2
    %v957 = vmax.f32 %v955, %v956
    %v958 = vrot.slane %v957, 1
    %v959 = vmax.f32 %v957, %v958
    %v960 = vadd.f32 %v940, %v920
    %v961 = vadd.f32 %v959, %v921
    %v964 = vsel %vm232, %v961, %v960
    %v968 = vsel %vm232, %v921, %v920
    %969 = vrot.lane.b32.xlu0 %v968, 64
    %v970 = vpop.permute.xlu0 %969
    %v972 = vsel %vm558, %v964, %v970
    %973 = vst [vmem:[#allocation2] sm:$0x3] %v972
    // Predicated region
    $region22: #{tpu_custom_call.1} parent=1 // pred_check
      _
    $region23: #{tpu_custom_call.1} parent=1 // pred_check_branch
      %975 = sbr.rel (0) target = $region25
    $region24: #{tpu_custom_call.1} parent=1 // pred_region
      %s977 = ssub.s32 32, 32
      %978 = vsyncadd [#allocation3], %s977
      %s980 = sshll.u32 [#allocation2], 4
      %s981 = int_to_ptr.vmem [resolvable:$true] %s980
      %983 = dma.vmem_to_hbm [thread:$0]  %s981, 32, %s5, [#allocation3]
    $region25: #{tpu_custom_call.1} parent=1 // pred_fallthru
      _
    // Predicated region
    $region26: #{tpu_custom_call.1} parent=1 // pred_check
      _
    $region27: #{tpu_custom_call.1} parent=1 // pred_check_branch
      %985 = sbr.rel (0) target = $region29
    $region28: #{tpu_custom_call.1} parent=1 // pred_region
      %986 = dma.done [#allocation3], 32
    $region29: #{tpu_custom_call.1} parent=1 // pred_fallthru
      _
    %987 = vsyncpa [#allocation3], 1

</llo_original>
